<compile_context>
chip_gen: v7x
topology: tpu7x:2x2x1
jax: 0.10.0
libtpu: 0.0.40
codegen_flags: <defaults>
</compile_context>

<pallas_src>
import functools

import jax
import jax.numpy as jnp
from jax import lax
from jax.experimental import pallas as pl
from jax.experimental.pallas import tpu as pltpu


def bert_classifier_kernel(vl_ref, tok_ids_ref, seg_ids_ref,
                           tok_emb_ref, seg_emb_ref, wp_ref, bp_ref,
                           wc_ref, bc_ref, out_ref, *,
                           dr_rate, training, seed):
    tb, L = tok_ids_ref.shape
    V, H = tok_emb_ref.shape
    b0 = pl.program_id(0) * tb

    # --- gen_attention_mask built from SMEM scalars ---------------------------
    row = lax.broadcasted_iota(jnp.int32, (tb, 1), 0)
    vl_col = jnp.zeros((tb, 1), jnp.int32)
    for b in range(tb):                       # tb is small and static
        vl_col = jnp.where(row == b, vl_ref[b0 + b], vl_col)
    pos = lax.broadcasted_iota(jnp.int32, (tb, L), 1)
    valid = pos < vl_col                      # (tb, L) attention mask

    tok_ids = tok_ids_ref[...]
    seg_ids = seg_ids_ref[...]

    # --- synthetic encoder: masked-mean embedding + tanh pooler ---------------
    # masked token histogram: w_oh[b, v] = sum_l mask[b, l] * (tok[b, l] == v)
    masked_tok = jnp.where(valid, tok_ids, -1)            # invalid -> no match
    oh = (masked_tok[:, :, None] ==
          lax.broadcasted_iota(jnp.int32, (tb, L, V), 2)).astype(jnp.float32)
    w_oh = jnp.sum(oh, axis=1).astype(jnp.bfloat16)       # (tb, V), exact ints

    # pooled token-embedding sum: (tb, V) @ (V, H), bf16 MXU, f32 accumulate
    tok_sum = jnp.dot(w_oh, tok_emb_ref[...],
                      preferred_element_type=jnp.float32)  # (tb, H)

    # segment embedding (ids in {0,1}): pure-VPU weighted sum of the two rows
    nv = jnp.clip(vl_col, 0, L).astype(jnp.float32)        # (tb, 1) = sum(mask)
    n0 = jnp.sum(jnp.where(valid & (seg_ids == 0), 1.0, 0.0),
                 axis=1, keepdims=True)                    # (tb, 1)
    n1 = nv - n0
    seg_emb = seg_emb_ref[...]                             # (2, H) f32
    seg_sum = n0 * seg_emb[0:1, :] + n1 * seg_emb[1:2, :]  # (tb, H)

    denom = jnp.maximum(nv, 1.0)
    pooled_in = (tok_sum + seg_sum) / denom                # (tb, H) f32

    # pooler dense + tanh: bf16 MXU operands, f32 accumulate / elementwise
    pooler = jnp.tanh(
        jnp.dot(pooled_in.astype(jnp.bfloat16), wp_ref[...],
                preferred_element_type=jnp.float32) + bp_ref[...])

    # --- dropout: training only (PyTorch eval skips it) -----------------------
    if training and dr_rate:
        pltpu.prng_seed(seed + pl.program_id(0))
        bits = pltpu.bitcast(pltpu.prng_random_bits(pooler.shape), jnp.uint32)
        thresh = jnp.uint32(min(int(dr_rate * (2 ** 32)), 2 ** 32 - 1))
        pooler = jnp.where(bits >= thresh,
                           pooler * (1.0 / (1.0 - dr_rate)), 0.0)

    # --- classifier into a lane-dense (tb, 128) slab ---------------------------
    out_ref[...] = (jnp.dot(pooler, wc_ref[...],
                            preferred_element_type=jnp.float32) + bc_ref[...])


def bert_classifier(token_ids, valid_length, segment_ids, params, *,
                    dr_rate=None, training=False, seed=0, batch_tile=8):
    B, L = token_ids.shape
    V, H = params["tok_emb"].shape
    C = params["wc"].shape[1]
    tb = min(batch_tile, B)
    assert B % tb == 0, "batch must be divisible by the batch tile"

    LANES = 128  # lane-dense classifier slab; sliced back to C outside
    wc_p = jnp.zeros((H, LANES), jnp.float32).at[:, :C].set(
        params["wc"].astype(jnp.float32))
    bc_p = jnp.zeros((1, LANES), jnp.float32).at[:, :C].set(
        params["bc"].reshape(1, C).astype(jnp.float32))

    kernel = functools.partial(bert_classifier_kernel, dr_rate=dr_rate,
                               training=training, seed=seed)

    # explicit VMEM budget: every pipelined block double-buffered, plus slack
    block_bytes = (2 * tb * L * 4            # token_ids + segment_ids (int32)
                   + V * H * 2               # tok_emb (bf16)
                   + 2 * H * 4               # seg_emb (f32)
                   + H * H * 2               # wp (bf16)
                   + H * 4                   # bp (f32)
                   + H * LANES * 4 + LANES * 4   # wc_p, bc_p
                   + tb * LANES * 4)         # out block
    vmem_limit = int(min(max(2 * block_bytes + (2 << 20), 16 << 20), 64 << 20))

    grid_spec = pltpu.PrefetchScalarGridSpec(
        num_scalar_prefetch=1,                # valid_length lives in SMEM
        grid=(B // tb,),
        in_specs=[
            pl.BlockSpec((tb, L), lambda i, vl: (i, 0)),     # token_ids
            pl.BlockSpec((tb, L), lambda i, vl: (i, 0)),     # segment_ids
            pl.BlockSpec((V, H), lambda i, vl: (0, 0)),      # tok_emb (bf16)
            pl.BlockSpec((2, H), lambda i, vl: (0, 0)),      # seg_emb
            pl.BlockSpec((H, H), lambda i, vl: (0, 0)),      # wp (bf16)
            pl.BlockSpec((1, H), lambda i, vl: (0, 0)),      # bp
            pl.BlockSpec((H, LANES), lambda i, vl: (0, 0)),  # wc (padded)
            pl.BlockSpec((1, LANES), lambda i, vl: (0, 0)),  # bc (padded)
        ],
        out_specs=pl.BlockSpec((tb, LANES), lambda i, vl: (i, 0)),
    )

    logits_padded = pl.pallas_call(
        kernel,
        out_shape=jax.ShapeDtypeStruct((B, LANES), jnp.float32),
        grid_spec=grid_spec,
        compiler_params=pltpu.CompilerParams(
            dimension_semantics=("parallel",),
            vmem_limit_bytes=vmem_limit,
        ),
    )(valid_length.astype(jnp.int32).reshape(B),
      token_ids.astype(jnp.int32), segment_ids.astype(jnp.int32),
      params["tok_emb"].astype(jnp.bfloat16),
      params["seg_emb"].astype(jnp.float32),
      params["wp"].astype(jnp.bfloat16),
      params["bp"].reshape(1, H).astype(jnp.float32),
      wc_p, bc_p)

    return logits_padded[:, :C]


def bert_classifier_ref(token_ids, valid_length, segment_ids, params):
    """Pure-JAX reference (eval mode: dropout is identity)."""
    B, L = token_ids.shape
    mask = (jnp.arange(L)[None, :] < valid_length[:, None]).astype(jnp.float32)
    tok_e = params["tok_emb"].astype(jnp.float32)[token_ids]     # (B, L, H)
    seg_e = params["seg_emb"].astype(jnp.float32)[segment_ids]   # (B, L, H)
    x = tok_e + seg_e
    denom = jnp.maximum(mask.sum(1, keepdims=True), 1.0)
    pooled_in = (x * mask[:, :, None]).sum(1) / denom
    pooler = jnp.tanh(pooled_in @ params["wp"].astype(jnp.float32)
                      + params["bp"])
    return pooler @ params["wc"] + params["bc"]


def init_params(key, vocab_size, hidden_size, num_classes):
    ks = jax.random.split(key, 6)
    s = 0.02
    return {
        "tok_emb": (s * jax.random.normal(ks[0], (vocab_size, hidden_size))
                    ).astype(jnp.bfloat16),
        "seg_emb": s * jax.random.normal(ks[1], (2, hidden_size), jnp.float32),
        "wp": (s * jax.random.normal(ks[2], (hidden_size, hidden_size))
               ).astype(jnp.bfloat16),
        "bp": s * jax.random.normal(ks[3], (1, hidden_size), jnp.float32),
        "wc": s * jax.random.normal(ks[4], (hidden_size, num_classes), jnp.float32),
        "bc": s * jax.random.normal(ks[5], (1, num_classes), jnp.float32),
    }


if __name__ == "__main__":
    B, L, H, V, C = 16, 16, 32, 64, 3

    key = jax.random.PRNGKey(0)
    k_tok, k_len, k_seg, k_par = jax.random.split(key, 4)

    token_ids = jax.random.randint(k_tok, (B, L), 0, V, dtype=jnp.int32)
    valid_length = jax.random.randint(k_len, (B,), 1, L + 1, dtype=jnp.int32)
    segment_ids = jax.random.randint(k_seg, (B, L), 0, 2, dtype=jnp.int32)

    params = init_params(k_par, V, H, C)

    # Inference path (matches PyTorch eval: dropout disabled).
    logits = bert_classifier(token_ids, valid_length, segment_ids, params,
                             dr_rate=0.1, training=False, seed=0, batch_tile=8)
    logits = jax.block_until_ready(logits)

    ref = bert_classifier_ref(token_ids, valid_length, segment_ids, params)

    assert logits.shape == (B, C) and logits.dtype == jnp.float32
    assert bool(jnp.allclose(logits, ref, atol=1e-2, rtol=1e-2)), \
        "kernel/reference mismatch"
    print("KERNEL_OK")
</pallas_src>

<mosaic_0001>
module attributes {stable_mosaic.version = 11 : i64} {
  func.func @bert_classifier_kernel(%arg0: i32, %arg1: memref<16xi32, #tpu.memory_space<smem>>, %arg2: memref<8x16xi32, #tpu.memory_space<vmem>>, %arg3: memref<8x16xi32, #tpu.memory_space<vmem>>, %arg4: memref<64x32xbf16, #tpu.memory_space<vmem>>, %arg5: memref<2x32xf32, #tpu.memory_space<vmem>>, %arg6: memref<32x32xbf16, #tpu.memory_space<vmem>>, %arg7: memref<1x32xf32, #tpu.memory_space<vmem>>, %arg8: memref<32x128xf32, #tpu.memory_space<vmem>>, %arg9: memref<1x128xf32, #tpu.memory_space<vmem>>, %arg10: memref<8x128xf32, #tpu.memory_space<vmem>>) attributes {dimension_semantics = [#tpu.dimension_semantics<parallel>], iteration_bounds = array<i64: 2>, scalar_prefetch = 1 : i64, scratch_operands = 0 : i64, tpu.core_type = #tpu.core_type<tc>, window_params = [{transform_indices = @transform_0, window_bounds = array<i64: 8, 16>}, {transform_indices = @transform_1, window_bounds = array<i64: 8, 16>}, {pipeline_mode = #tpu.pipeline_mode<synchronous>, transform_indices = @transform_2, window_bounds = array<i64: 64, 32>}, {pipeline_mode = #tpu.pipeline_mode<synchronous>, transform_indices = @transform_3, window_bounds = array<i64: 2, 32>}, {pipeline_mode = #tpu.pipeline_mode<synchronous>, transform_indices = @transform_4, window_bounds = array<i64: 32, 32>}, {pipeline_mode = #tpu.pipeline_mode<synchronous>, transform_indices = @transform_5, window_bounds = array<i64: 1, 32>}, {pipeline_mode = #tpu.pipeline_mode<synchronous>, transform_indices = @transform_6, window_bounds = array<i64: 32, 128>}, {pipeline_mode = #tpu.pipeline_mode<synchronous>, transform_indices = @transform_7, window_bounds = array<i64: 1, 128>}, {transform_indices = @transform_8, window_bounds = array<i64: 8, 128>}]} {
    %c8_i32 = arith.constant 8 : i32
    %0 = arith.muli %arg0, %c8_i32 : i32
    %1 = tpu.iota {dimensions = array<i32: 0>} : vector<8x1xi32>
    %c0_i32 = arith.constant 0 : i32
    %2 = vector.broadcast %c0_i32 : i32 to vector<8x1xi32>
    %c0_i32_0 = arith.constant 0 : i32
    %3 = vector.broadcast %c0_i32_0 : i32 to vector<8x1xi32>
    %4 = arith.cmpi eq, %1, %3 : vector<8x1xi32>
    %c0_i32_1 = arith.constant 0 : i32
    %5 = arith.addi %0, %c0_i32_1 : i32
    %6 = arith.index_cast %5 : i32 to index
    %7 = memref.load %arg1[%6] : memref<16xi32, #tpu.memory_space<smem>>
    %8 = vector.broadcast %7 : i32 to vector<8x1xi32>
    %9 = arith.select %4, %8, %2 : vector<8x1xi1>, vector<8x1xi32>
    %c1_i32 = arith.constant 1 : i32
    %10 = vector.broadcast %c1_i32 : i32 to vector<8x1xi32>
    %11 = arith.cmpi eq, %1, %10 : vector<8x1xi32>
    %c1_i32_2 = arith.constant 1 : i32
    %12 = arith.addi %0, %c1_i32_2 : i32
    %13 = arith.index_cast %12 : i32 to index
    %14 = memref.load %arg1[%13] : memref<16xi32, #tpu.memory_space<smem>>
    %15 = vector.broadcast %14 : i32 to vector<8x1xi32>
    %16 = arith.select %11, %15, %9 : vector<8x1xi1>, vector<8x1xi32>
    %c2_i32 = arith.constant 2 : i32
    %17 = vector.broadcast %c2_i32 : i32 to vector<8x1xi32>
    %18 = arith.cmpi eq, %1, %17 : vector<8x1xi32>
    %c2_i32_3 = arith.constant 2 : i32
    %19 = arith.addi %0, %c2_i32_3 : i32
    %20 = arith.index_cast %19 : i32 to index
    %21 = memref.load %arg1[%20] : memref<16xi32, #tpu.memory_space<smem>>
    %22 = vector.broadcast %21 : i32 to vector<8x1xi32>
    %23 = arith.select %18, %22, %16 : vector<8x1xi1>, vector<8x1xi32>
    %c3_i32 = arith.constant 3 : i32
    %24 = vector.broadcast %c3_i32 : i32 to vector<8x1xi32>
    %25 = arith.cmpi eq, %1, %24 : vector<8x1xi32>
    %c3_i32_4 = arith.constant 3 : i32
    %26 = arith.addi %0, %c3_i32_4 : i32
    %27 = arith.index_cast %26 : i32 to index
    %28 = memref.load %arg1[%27] : memref<16xi32, #tpu.memory_space<smem>>
    %29 = vector.broadcast %28 : i32 to vector<8x1xi32>
    %30 = arith.select %25, %29, %23 : vector<8x1xi1>, vector<8x1xi32>
    %c4_i32 = arith.constant 4 : i32
    %31 = vector.broadcast %c4_i32 : i32 to vector<8x1xi32>
    %32 = arith.cmpi eq, %1, %31 : vector<8x1xi32>
    %c4_i32_5 = arith.constant 4 : i32
    %33 = arith.addi %0, %c4_i32_5 : i32
    %34 = arith.index_cast %33 : i32 to index
    %35 = memref.load %arg1[%34] : memref<16xi32, #tpu.memory_space<smem>>
    %36 = vector.broadcast %35 : i32 to vector<8x1xi32>
    %37 = arith.select %32, %36, %30 : vector<8x1xi1>, vector<8x1xi32>
    %c5_i32 = arith.constant 5 : i32
    %38 = vector.broadcast %c5_i32 : i32 to vector<8x1xi32>
    %39 = arith.cmpi eq, %1, %38 : vector<8x1xi32>
    %c5_i32_6 = arith.constant 5 : i32
    %40 = arith.addi %0, %c5_i32_6 : i32
    %41 = arith.index_cast %40 : i32 to index
    %42 = memref.load %arg1[%41] : memref<16xi32, #tpu.memory_space<smem>>
    %43 = vector.broadcast %42 : i32 to vector<8x1xi32>
    %44 = arith.select %39, %43, %37 : vector<8x1xi1>, vector<8x1xi32>
    %c6_i32 = arith.constant 6 : i32
    %45 = vector.broadcast %c6_i32 : i32 to vector<8x1xi32>
    %46 = arith.cmpi eq, %1, %45 : vector<8x1xi32>
    %c6_i32_7 = arith.constant 6 : i32
    %47 = arith.addi %0, %c6_i32_7 : i32
    %48 = arith.index_cast %47 : i32 to index
    %49 = memref.load %arg1[%48] : memref<16xi32, #tpu.memory_space<smem>>
    %50 = vector.broadcast %49 : i32 to vector<8x1xi32>
    %51 = arith.select %46, %50, %44 : vector<8x1xi1>, vector<8x1xi32>
    %c7_i32 = arith.constant 7 : i32
    %52 = vector.broadcast %c7_i32 : i32 to vector<8x1xi32>
    %53 = arith.cmpi eq, %1, %52 : vector<8x1xi32>
    %c7_i32_8 = arith.constant 7 : i32
    %54 = arith.addi %0, %c7_i32_8 : i32
    %55 = arith.index_cast %54 : i32 to index
    %56 = memref.load %arg1[%55] : memref<16xi32, #tpu.memory_space<smem>>
    %57 = vector.broadcast %56 : i32 to vector<8x1xi32>
    %58 = arith.select %53, %57, %51 : vector<8x1xi1>, vector<8x1xi32>
    %59 = tpu.iota {dimensions = array<i32: 1>} : vector<8x16xi32>
    %60 = vector.broadcast %58 : vector<8x1xi32> to vector<8x16xi32>
    %61 = arith.cmpi slt, %59, %60 : vector<8x16xi32>
    %c0 = arith.constant 0 : index
    %c0_9 = arith.constant 0 : index
    %62 = vector.load %arg2[%c0, %c0_9] : memref<8x16xi32, #tpu.memory_space<vmem>>, vector<8x16xi32>
    %c0_10 = arith.constant 0 : index
    %c0_11 = arith.constant 0 : index
    %63 = vector.load %arg3[%c0_10, %c0_11] : memref<8x16xi32, #tpu.memory_space<vmem>>, vector<8x16xi32>
    %c-1_i32 = arith.constant -1 : i32
    %64 = vector.broadcast %c-1_i32 : i32 to vector<8x16xi32>
    %65 = arith.select %61, %62, %64 : vector<8x16xi1>, vector<8x16xi32>
    %66 = vector.shape_cast %65 : vector<8x16xi32> to vector<8x16x1xi32>
    %67 = tpu.iota {dimensions = array<i32: 2>} : vector<8x16x64xi32>
    %68 = vector.broadcast %66 : vector<8x16x1xi32> to vector<8x16x64xi32>
    %69 = arith.cmpi eq, %68, %67 : vector<8x16x64xi32>
    %70 = arith.extui %69 : vector<8x16x64xi1> to vector<8x16x64xi32>
    %71 = arith.sitofp %70 : vector<8x16x64xi32> to vector<8x16x64xf32>
    %cst = arith.constant dense<0.000000e+00> : vector<8x64xf32>
    %72 = vector.multi_reduction <add>, %71, %cst [1] : vector<8x16x64xf32> to vector<8x64xf32>
    %73 = arith.truncf %72 : vector<8x64xf32> to vector<8x64xbf16>
    %c0_12 = arith.constant 0 : index
    %c0_13 = arith.constant 0 : index
    %74 = vector.load %arg4[%c0_12, %c0_13] : memref<64x32xbf16, #tpu.memory_space<vmem>>, vector<64x32xbf16>
    %cst_14 = arith.constant dense<0.000000e+00> : vector<8x32xf32>
    %75 = tpu.matmul %73, %74, %cst_14 {dimension_numbers = #tpu.dot_dimension_numbers<[1], [0], [0], [1], [0, 0, 1, 1], [], []>} : vector<8x64xbf16>, vector<64x32xbf16>, vector<8x32xf32> -> vector<8x32xf32>
    %c0_i32_15 = arith.constant 0 : i32
    %c16_i32 = arith.constant 16 : i32
    %76 = vector.broadcast %c0_i32_15 : i32 to vector<8x1xi32>
    %77 = arith.maxsi %76, %58 : vector<8x1xi32>
    %78 = vector.broadcast %c16_i32 : i32 to vector<8x1xi32>
    %79 = arith.minsi %78, %77 : vector<8x1xi32>
    %80 = arith.sitofp %79 : vector<8x1xi32> to vector<8x1xf32>
    %c0_i32_16 = arith.constant 0 : i32
    %81 = vector.broadcast %c0_i32_16 : i32 to vector<8x16xi32>
    %82 = arith.cmpi eq, %63, %81 : vector<8x16xi32>
    %83 = arith.andi %61, %82 : vector<8x16xi1>
    %cst_17 = arith.constant 1.000000e+00 : f32
    %cst_18 = arith.constant 0.000000e+00 : f32
    %84 = vector.broadcast %cst_17 : f32 to vector<8x16xf32>
    %85 = vector.broadcast %cst_18 : f32 to vector<8x16xf32>
    %86 = arith.select %83, %84, %85 : vector<8x16xi1>, vector<8x16xf32>
    %cst_19 = arith.constant dense<0.000000e+00> : vector<8xf32>
    %87 = vector.multi_reduction <add>, %86, %cst_19 [1] : vector<8x16xf32> to vector<8xf32>
    %88 = vector.shape_cast %87 : vector<8xf32> to vector<8x1xf32>
    %89 = arith.subf %80, %88 : vector<8x1xf32>
    %c0_20 = arith.constant 0 : index
    %c0_21 = arith.constant 0 : index
    %90 = vector.load %arg5[%c0_20, %c0_21] : memref<2x32xf32, #tpu.memory_space<vmem>>, vector<2x32xf32>
    %91 = vector.extract_strided_slice %90 {offsets = [0, 0], sizes = [1, 32], strides = [1, 1]} : vector<2x32xf32> to vector<1x32xf32>
    %92 = vector.broadcast %88 : vector<8x1xf32> to vector<8x32xf32>
    %93 = vector.broadcast %91 : vector<1x32xf32> to vector<8x32xf32>
    %94 = arith.mulf %92, %93 : vector<8x32xf32>
    %95 = vector.extract_strided_slice %90 {offsets = [1, 0], sizes = [1, 32], strides = [1, 1]} : vector<2x32xf32> to vector<1x32xf32>
    %96 = vector.broadcast %89 : vector<8x1xf32> to vector<8x32xf32>
    %97 = vector.broadcast %95 : vector<1x32xf32> to vector<8x32xf32>
    %98 = arith.mulf %96, %97 : vector<8x32xf32>
    %99 = arith.addf %94, %98 : vector<8x32xf32>
    %cst_22 = arith.constant 1.000000e+00 : f32
    %100 = vector.broadcast %cst_22 : f32 to vector<8x1xf32>
    %101 = arith.maximumf %80, %100 : vector<8x1xf32>
    %102 = arith.addf %75, %99 : vector<8x32xf32>
    %103 = vector.broadcast %101 : vector<8x1xf32> to vector<8x32xf32>
    %104 = arith.divf %102, %103 : vector<8x32xf32>
    %105 = arith.truncf %104 : vector<8x32xf32> to vector<8x32xbf16>
    %c0_23 = arith.constant 0 : index
    %c0_24 = arith.constant 0 : index
    %106 = vector.load %arg6[%c0_23, %c0_24] : memref<32x32xbf16, #tpu.memory_space<vmem>>, vector<32x32xbf16>
    %cst_25 = arith.constant dense<0.000000e+00> : vector<8x32xf32>
    %107 = tpu.matmul %105, %106, %cst_25 {dimension_numbers = #tpu.dot_dimension_numbers<[1], [0], [0], [1], [0, 0, 1, 1], [], []>} : vector<8x32xbf16>, vector<32x32xbf16>, vector<8x32xf32> -> vector<8x32xf32>
    %c0_26 = arith.constant 0 : index
    %c0_27 = arith.constant 0 : index
    %108 = vector.load %arg7[%c0_26, %c0_27] : memref<1x32xf32, #tpu.memory_space<vmem>>, vector<1x32xf32>
    %109 = vector.broadcast %108 : vector<1x32xf32> to vector<8x32xf32>
    %110 = arith.addf %107, %109 : vector<8x32xf32>
    %111 = math.tanh %110 : vector<8x32xf32>
    %c0_28 = arith.constant 0 : index
    %c0_29 = arith.constant 0 : index
    %112 = vector.load %arg8[%c0_28, %c0_29] : memref<32x128xf32, #tpu.memory_space<vmem>>, vector<32x128xf32>
    %cst_30 = arith.constant dense<0.000000e+00> : vector<8x128xf32>
    %113 = tpu.matmul %111, %112, %cst_30 {dimension_numbers = #tpu.dot_dimension_numbers<[1], [0], [0], [1], [0, 0, 1, 1], [], []>} : vector<8x32xf32>, vector<32x128xf32>, vector<8x128xf32> -> vector<8x128xf32>
    %c0_31 = arith.constant 0 : index
    %c0_32 = arith.constant 0 : index
    %114 = vector.load %arg9[%c0_31, %c0_32] : memref<1x128xf32, #tpu.memory_space<vmem>>, vector<1x128xf32>
    %115 = vector.broadcast %114 : vector<1x128xf32> to vector<8x128xf32>
    %116 = arith.addf %113, %115 : vector<8x128xf32>
    %c0_33 = arith.constant 0 : index
    %c0_34 = arith.constant 0 : index
    %117 = vector.load %arg10[%c0_33, %c0_34] : memref<8x128xf32, #tpu.memory_space<vmem>>, vector<8x128xf32>
    tpu.vector_store %arg10[%c0_33, %c0_34], %116 {strides = array<i32>} : memref<8x128xf32, #tpu.memory_space<vmem>>, vector<8x128xf32>,
    return
  }
  func.func @transform_0(%arg0: i32, %arg1: memref<16xi32, #tpu.memory_space<smem>>) -> (i32, i32) {
    %c0_i32 = arith.constant 0 : i32
    %c0_i32_0 = arith.constant 0 : i32
    return %arg0, %c0_i32 : i32, i32
  }
  func.func @transform_1(%arg0: i32, %arg1: memref<16xi32, #tpu.memory_space<smem>>) -> (i32, i32) {
    %c0_i32 = arith.constant 0 : i32
    %c0_i32_0 = arith.constant 0 : i32
    return %arg0, %c0_i32 : i32, i32
  }
  func.func @transform_2(%arg0: i32, %arg1: memref<16xi32, #tpu.memory_space<smem>>) -> (i32, i32) {
    %c0_i32 = arith.constant 0 : i32
    %c0_i32_0 = arith.constant 0 : i32
    %c0_i32_1 = arith.constant 0 : i32
    return %c0_i32, %c0_i32_0 : i32, i32
  }
  func.func @transform_3(%arg0: i32, %arg1: memref<16xi32, #tpu.memory_space<smem>>) -> (i32, i32) {
    %c0_i32 = arith.constant 0 : i32
    %c0_i32_0 = arith.constant 0 : i32
    %c0_i32_1 = arith.constant 0 : i32
    return %c0_i32, %c0_i32_0 : i32, i32
  }
  func.func @transform_4(%arg0: i32, %arg1: memref<16xi32, #tpu.memory_space<smem>>) -> (i32, i32) {
    %c0_i32 = arith.constant 0 : i32
    %c0_i32_0 = arith.constant 0 : i32
    %c0_i32_1 = arith.constant 0 : i32
    return %c0_i32, %c0_i32_0 : i32, i32
  }
  func.func @transform_5(%arg0: i32, %arg1: memref<16xi32, #tpu.memory_space<smem>>) -> (i32, i32) {
    %c0_i32 = arith.constant 0 : i32
    %c0_i32_0 = arith.constant 0 : i32
    %c0_i32_1 = arith.constant 0 : i32
    return %c0_i32, %c0_i32_0 : i32, i32
  }
  func.func @transform_6(%arg0: i32, %arg1: memref<16xi32, #tpu.memory_space<smem>>) -> (i32, i32) {
    %c0_i32 = arith.constant 0 : i32
    %c0_i32_0 = arith.constant 0 : i32
    %c0_i32_1 = arith.constant 0 : i32
    return %c0_i32, %c0_i32_0 : i32, i32
  }
  func.func @transform_7(%arg0: i32, %arg1: memref<16xi32, #tpu.memory_space<smem>>) -> (i32, i32) {
    %c0_i32 = arith.constant 0 : i32
    %c0_i32_0 = arith.constant 0 : i32
    %c0_i32_1 = arith.constant 0 : i32
    return %c0_i32, %c0_i32_0 : i32, i32
  }
  func.func @transform_8(%arg0: i32, %arg1: memref<16xi32, #tpu.memory_space<smem>>) -> (i32, i32) {
    %c0_i32 = arith.constant 0 : i32
    %c0_i32_0 = arith.constant 0 : i32
    return %arg0, %c0_i32 : i32, i32
  }
}

</mosaic_0001>

<llo_original>
// kernel: tpu_custom_call.1
$region0: #{tpu_custom_call.1}
  #allocation0 [shape = 'u32[]', space=smem, size = 0x4, offset = 0x4, fixed_abs, tag = 'smem constant byte address 0x4 - core index']
  #allocation1 [shape = 'u32[144,128]{1,0:T(1,128)}', space=vmem, size = 0x12000, scoped, tag = 'internal scratch']
  #allocation2 [shape = 's32[1]{0}', space=sflag, size = 0x4, scoped, tag = 'scoped memory for tpu_custom_call.1']
  #allocation3 [shape = 'u8[512]{0}', space=smem, size = 0x200, scoped, tag = 'prefetched SMEM operand 0']
  %s0 = inlined_call_operand.hbm [shape: s32[16], index: 0, kind: input, shape index: {}]
  %s1 = inlined_call_operand.vmem [shape: s32[16,16], index: 1, kind: input, shape index: {}]
  %s2 = inlined_call_operand.hbm [shape: s32[16,16], index: 2, kind: input, shape index: {}]
  %s3 = inlined_call_operand.vmem [shape: bf16[64,32], index: 3, kind: input, shape index: {}]
  %s4 = inlined_call_operand.vmem [shape: f32[2,32], index: 4, kind: input, shape index: {}]
  %s5 = inlined_call_operand.vmem [shape: bf16[32,32], index: 5, kind: input, shape index: {}]
  %s6 = inlined_call_operand.vmem [shape: f32[1,32], index: 6, kind: input, shape index: {}]
  %s7 = inlined_call_operand.vmem [shape: f32[32,128], index: 7, kind: input, shape index: {}]
  %s8 = inlined_call_operand.vmem [shape: f32[1,128], index: 8, kind: input, shape index: {}]
  %s9 = inlined_call_operand.hbm [shape: f32[16,128], index: 9, kind: output, shape index: {}]
  %s10 = sld [smem:[#allocation0]]
  $region69: #{tpu_custom_call.1} parent=0
    _
  %s12 = ssub.s32 1, %s10
  %s13 = scalar_select 0, %s12, %s10
  %15 = dma.hbm_to_smem %s0, 16, [#allocation3], [#allocation2]
  %16 = dma.done [#allocation2], 16
  %17 = sfence
  $region1: #{tpu_custom_call.1} parent=0
    #allocation4 [shape = 'u8[8192]{0}', space=vmem, size = 0x2000, scoped, tag = 'input window, operand 2']
    #allocation5 [shape = 's32[2]{0}', space=sflag, size = 0x8, scoped, tag = 'scoped memory for tpu_custom_call.1']
    #allocation6 [shape = 's32[2]{0}', space=sflag, size = 0x8, scoped, tag = 'scoped memory for tpu_custom_call.1']
    #allocation7 [shape = 'u8[8192]{0}', space=vmem, size = 0x2000, scoped, tag = 'output window, operand 0']
    %18 = vsyncpa [#allocation5], 0
    %s19 = scalar_lea.sflag [#allocation5], 1
    %20 = vsyncpa %s19, 0
    %21 = vsyncpa [#allocation6], 0
    %s22 = scalar_lea.sflag [#allocation6], 1
    %23 = vsyncpa %s22, 0
    loop: start=0, step=1, limit=4
    $region2: #{tpu_custom_call.1} parent=1 // loop_pre_header
      _
    $region3: #{tpu_custom_call.1} parent=1 // loop_header
      %s25 = sphi 0, %s29
      %p26 = scmp.ge.s32.totalorder %s25, 4
      %s35 = sphi 0, %s37
      %s38 = sphi 0, %s35
      %s39 = sphi 0, %s38
      %s55 = sphi 0, %s39
      %s61 = sphi 0, %s63
      %s64 = sphi 0, %s61
      %s65 = sphi 0, %s64
      %s81 = sphi 0, %s65
      %s85 = sphi 0, %s85
      %s87 = sphi 0, %s85
      %s88 = sphi 0, %s87
      %s102 = sphi 0, %s88
      %s106 = sphi 0, %s106
      %s108 = sphi 0, %s106
      %s109 = sphi 0, %s108
      %s123 = sphi 0, %s109
      %s127 = sphi 0, %s127
      %s129 = sphi 0, %s127
      %s130 = sphi 0, %s129
      %s144 = sphi 0, %s130
      %s148 = sphi 0, %s148
      %s150 = sphi 0, %s148
      %s151 = sphi 0, %s150
      %s165 = sphi 0, %s151
      %s169 = sphi 0, %s169
      %s171 = sphi 0, %s169
      %s172 = sphi 0, %s171
      %s186 = sphi 0, %s172
      %s190 = sphi 0, %s190
      %s192 = sphi 0, %s190
      %s193 = sphi 0, %s192
      %s207 = sphi 0, %s193
      %s213 = sphi 0, %s215
      %s216 = sphi 0, %s213
      %s217 = sphi 0, %s216
      %s233 = sphi 0, %s217
    $region4: #{tpu_custom_call.1} parent=1 // loop_header_branch
      %28 = sbr.rel (%p26) target = $region8
    $region5: #{tpu_custom_call.1} parent=1 // loop_body
      %s30 = ssub.s32 %s25, 1
      %s31 = ssub.s32 %s25, 2
      %s32 = sadd.s32 %s25, 1
      %s33 = ssub.s32 %s25, %s32
      %p34 = scmp.eq.s32.totalorder %s33, 0
      %s36 = sadd.s32 %s35, 1
      %s37 = scalar_select %p34, %s35, %s36
      %p40 = pneg %p34
      %p41 = scmp.eq.s32.totalorder %s25, 1
      %p42 = por %p40, %p41
      %p43 = scmp.ne.s32.totalorder %s35, %s38
      %p44 = scmp.eq.s32.totalorder %s25, 0
      %p45 = por %p43, %p44
      %p46 = scmp.ne.s32.totalorder %s35, %s38
      %p47 = scmp.eq.s32.totalorder %s30, 1
      %p48 = por %p46, %p47
      %p49 = scmp.ne.s32.totalorder %s38, %s39
      %p50 = scmp.eq.s32.totalorder %s30, 0
      %p51 = por %p49, %p50
      %p52 = scmp.ne.s32.totalorder %s38, %s39
      %p53 = scmp.eq.s32.totalorder %s31, 1
      %p54 = por %p52, %p53
      %p56 = scmp.ne.s32.totalorder %s39, %s55
      %p57 = scmp.eq.s32.totalorder %s31, 0
      %p58 = por %p56, %p57
      %s59 = ssub.s32 %s25, %s32
      %p60 = scmp.eq.s32.totalorder %s59, 0
      %s62 = sadd.s32 %s61, 1
      %s63 = scalar_select %p60, %s61, %s62
      %p66 = pneg %p60
      %p67 = scmp.eq.s32.totalorder %s25, 1
      %p68 = por %p66, %p67
      %p69 = scmp.ne.s32.totalorder %s61, %s64
      %p70 = scmp.eq.s32.totalorder %s25, 0
      %p71 = por %p69, %p70
      %p72 = scmp.ne.s32.totalorder %s61, %s64
      %p73 = scmp.eq.s32.totalorder %s30, 1
      %p74 = por %p72, %p73
      %p75 = scmp.ne.s32.totalorder %s64, %s65
      %p76 = scmp.eq.s32.totalorder %s30, 0
      %p77 = por %p75, %p76
      %p78 = scmp.ne.s32.totalorder %s64, %s65
      %p79 = scmp.eq.s32.totalorder %s31, 1
      %p80 = por %p78, %p79
      %p82 = scmp.ne.s32.totalorder %s65, %s81
      %p83 = scmp.eq.s32.totalorder %s31, 0
      %p84 = por %p82, %p83
      %s86 = sadd.s32 %s85, 1
      %p89 = scmp.eq.s32.totalorder %s25, 1
      %p90 = scmp.ne.s32.totalorder %s85, %s87
      %p91 = scmp.eq.s32.totalorder %s25, 0
      %p92 = por %p90, %p91
      %p93 = scmp.ne.s32.totalorder %s85, %s87
      %p94 = scmp.eq.s32.totalorder %s30, 1
      %p95 = por %p93, %p94
      %p96 = scmp.ne.s32.totalorder %s87, %s88
      %p97 = scmp.eq.s32.totalorder %s30, 0
      %p98 = por %p96, %p97
      %p99 = scmp.ne.s32.totalorder %s87, %s88
      %p100 = scmp.eq.s32.totalorder %s31, 1
      %p101 = por %p99, %p100
      %p103 = scmp.ne.s32.totalorder %s88, %s102
      %p104 = scmp.eq.s32.totalorder %s31, 0
      %p105 = por %p103, %p104
      %s107 = sadd.s32 %s106, 1
      %p110 = scmp.eq.s32.totalorder %s25, 1
      %p111 = scmp.ne.s32.totalorder %s106, %s108
      %p112 = scmp.eq.s32.totalorder %s25, 0
      %p113 = por %p111, %p112
      %p114 = scmp.ne.s32.totalorder %s106, %s108
      %p115 = scmp.eq.s32.totalorder %s30, 1
      %p116 = por %p114, %p115
      %p117 = scmp.ne.s32.totalorder %s108, %s109
      %p118 = scmp.eq.s32.totalorder %s30, 0
      %p119 = por %p117, %p118
      %p120 = scmp.ne.s32.totalorder %s108, %s109
      %p121 = scmp.eq.s32.totalorder %s31, 1
      %p122 = por %p120, %p121
      %p124 = scmp.ne.s32.totalorder %s109, %s123
      %p125 = scmp.eq.s32.totalorder %s31, 0
      %p126 = por %p124, %p125
      %s128 = sadd.s32 %s127, 1
      %p131 = scmp.eq.s32.totalorder %s25, 1
      %p132 = scmp.ne.s32.totalorder %s127, %s129
      %p133 = scmp.eq.s32.totalorder %s25, 0
      %p134 = por %p132, %p133
      %p135 = scmp.ne.s32.totalorder %s127, %s129
      %p136 = scmp.eq.s32.totalorder %s30, 1
      %p137 = por %p135, %p136
      %p138 = scmp.ne.s32.totalorder %s129, %s130
      %p139 = scmp.eq.s32.totalorder %s30, 0
      %p140 = por %p138, %p139
      %p141 = scmp.ne.s32.totalorder %s129, %s130
      %p142 = scmp.eq.s32.totalorder %s31, 1
      %p143 = por %p141, %p142
      %p145 = scmp.ne.s32.totalorder %s130, %s144
      %p146 = scmp.eq.s32.totalorder %s31, 0
      %p147 = por %p145, %p146
      %s149 = sadd.s32 %s148, 1
      %p152 = scmp.eq.s32.totalorder %s25, 1
      %p153 = scmp.ne.s32.totalorder %s148, %s150
      %p154 = scmp.eq.s32.totalorder %s25, 0
      %p155 = por %p153, %p154
      %p156 = scmp.ne.s32.totalorder %s148, %s150
      %p157 = scmp.eq.s32.totalorder %s30, 1
      %p158 = por %p156, %p157
      %p159 = scmp.ne.s32.totalorder %s150, %s151
      %p160 = scmp.eq.s32.totalorder %s30, 0
      %p161 = por %p159, %p160
      %p162 = scmp.ne.s32.totalorder %s150, %s151
      %p163 = scmp.eq.s32.totalorder %s31, 1
      %p164 = por %p162, %p163
      %p166 = scmp.ne.s32.totalorder %s151, %s165
      %p167 = scmp.eq.s32.totalorder %s31, 0
      %p168 = por %p166, %p167
      %s170 = sadd.s32 %s169, 1
      %p173 = scmp.eq.s32.totalorder %s25, 1
      %p174 = scmp.ne.s32.totalorder %s169, %s171
      %p175 = scmp.eq.s32.totalorder %s25, 0
      %p176 = por %p174, %p175
      %p177 = scmp.ne.s32.totalorder %s169, %s171
      %p178 = scmp.eq.s32.totalorder %s30, 1
      %p179 = por %p177, %p178
      %p180 = scmp.ne.s32.totalorder %s171, %s172
      %p181 = scmp.eq.s32.totalorder %s30, 0
      %p182 = por %p180, %p181
      %p183 = scmp.ne.s32.totalorder %s171, %s172
      %p184 = scmp.eq.s32.totalorder %s31, 1
      %p185 = por %p183, %p184
      %p187 = scmp.ne.s32.totalorder %s172, %s186
      %p188 = scmp.eq.s32.totalorder %s31, 0
      %p189 = por %p187, %p188
      %s191 = sadd.s32 %s190, 1
      %p194 = scmp.eq.s32.totalorder %s25, 1
      %p195 = scmp.ne.s32.totalorder %s190, %s192
      %p196 = scmp.eq.s32.totalorder %s25, 0
      %p197 = por %p195, %p196
      %p198 = scmp.ne.s32.totalorder %s190, %s192
      %p199 = scmp.eq.s32.totalorder %s30, 1
      %p200 = por %p198, %p199
      %p201 = scmp.ne.s32.totalorder %s192, %s193
      %p202 = scmp.eq.s32.totalorder %s30, 0
      %p203 = por %p201, %p202
      %p204 = scmp.ne.s32.totalorder %s192, %s193
      %p205 = scmp.eq.s32.totalorder %s31, 1
      %p206 = por %p204, %p205
      %p208 = scmp.ne.s32.totalorder %s193, %s207
      %p209 = scmp.eq.s32.totalorder %s31, 0
      %p210 = por %p208, %p209
      %s211 = ssub.s32 %s25, %s32
      %p212 = scmp.eq.s32.totalorder %s211, 0
      %s214 = sadd.s32 %s213, 1
      %s215 = scalar_select %p212, %s213, %s214
      %p218 = pneg %p212
      %p219 = scmp.eq.s32.totalorder %s25, 1
      %p220 = por %p218, %p219
      %p221 = scmp.ne.s32.totalorder %s213, %s216
      %p222 = scmp.eq.s32.totalorder %s25, 0
      %p223 = por %p221, %p222
      %p224 = scmp.ne.s32.totalorder %s213, %s216
      %p225 = scmp.eq.s32.totalorder %s30, 1
      %p226 = por %p224, %p225
      %p227 = scmp.ne.s32.totalorder %s216, %s217
      %p228 = scmp.eq.s32.totalorder %s30, 0
      %p229 = por %p227, %p228
      %p230 = scmp.ne.s32.totalorder %s216, %s217
      %p231 = scmp.eq.s32.totalorder %s31, 1
      %p232 = por %p230, %p231
      %p234 = scmp.ne.s32.totalorder %s217, %s233
      %p235 = scmp.eq.s32.totalorder %s31, 0
      %p236 = por %p234, %p235
      %p237 = scmp.le.s32.totalorder 1, %s25
      %p238 = scmp.lt.s32.totalorder %s25, 3
      %p239 = pnand %p237, %p238
      %p240 = pneg %p239
      // Predicated region
      $region9: #{tpu_custom_call.1} parent=5 // pred_check
        _
      $region10: #{tpu_custom_call.1} parent=5 // pred_check_branch
        %242 = sbr.rel (%p239) target = $region12
      $region11: #{tpu_custom_call.1} parent=5 // pred_region
        %s243 = ssub.s32 %s25, 1
        // Predicated region
        $region13: #{tpu_custom_call.1} parent=11 // pred_check
          %p244 = pneg %p98
        $region14: #{tpu_custom_call.1} parent=11 // pred_check_branch
          %246 = sbr.rel (%p244) target = $region16
        $region15: #{tpu_custom_call.1} parent=11 // pred_region
          _
        $region16: #{tpu_custom_call.1} parent=11 // pred_fallthru
          _
        // Predicated region
        $region17: #{tpu_custom_call.1} parent=11 // pred_check
          %p247 = pneg %p119
        $region18: #{tpu_custom_call.1} parent=11 // pred_check_branch
          %249 = sbr.rel (%p247) target = $region20
        $region19: #{tpu_custom_call.1} parent=11 // pred_region
          _
        $region20: #{tpu_custom_call.1} parent=11 // pred_fallthru
          _
        // Predicated region
        $region21: #{tpu_custom_call.1} parent=11 // pred_check
          %p250 = pneg %p140
        $region22: #{tpu_custom_call.1} parent=11 // pred_check_branch
          %252 = sbr.rel (%p250) target = $region24
        $region23: #{tpu_custom_call.1} parent=11 // pred_region
          _
        $region24: #{tpu_custom_call.1} parent=11 // pred_fallthru
          _
        // Predicated region
        $region25: #{tpu_custom_call.1} parent=11 // pred_check
          %p253 = pneg %p161
        $region26: #{tpu_custom_call.1} parent=11 // pred_check_branch
          %255 = sbr.rel (%p253) target = $region28
        $region27: #{tpu_custom_call.1} parent=11 // pred_region
          _
        $region28: #{tpu_custom_call.1} parent=11 // pred_fallthru
          _
        // Predicated region
        $region29: #{tpu_custom_call.1} parent=11 // pred_check
          %p256 = pneg %p182
        $region30: #{tpu_custom_call.1} parent=11 // pred_check_branch
          %258 = sbr.rel (%p256) target = $region32
        $region31: #{tpu_custom_call.1} parent=11 // pred_region
          _
        $region32: #{tpu_custom_call.1} parent=11 // pred_fallthru
          _
        // Predicated region
        $region33: #{tpu_custom_call.1} parent=11 // pred_check
          %p259 = pneg %p203
        $region34: #{tpu_custom_call.1} parent=11 // pred_check_branch
          %261 = sbr.rel (%p259) target = $region36
        $region35: #{tpu_custom_call.1} parent=11 // pred_region
          _
        $region36: #{tpu_custom_call.1} parent=11 // pred_fallthru
          _
      $region12: #{tpu_custom_call.1} parent=5 // pred_fallthru
        _
      %p262 = scmp.lt.s32.totalorder %s25, 2
      // Predicated region
      $region37: #{tpu_custom_call.1} parent=5 // pred_check
        %p263 = pneg %p262
      $region38: #{tpu_custom_call.1} parent=5 // pred_check_branch
        %265 = sbr.rel (%p263) target = $region40
      $region39: #{tpu_custom_call.1} parent=5 // pred_region
        // Predicated region
        $region41: #{tpu_custom_call.1} parent=39 // pred_check
          %p266 = pneg %p45
        $region42: #{tpu_custom_call.1} parent=39 // pred_check_branch
          %268 = sbr.rel (%p266) target = $region44
        $region43: #{tpu_custom_call.1} parent=39 // pred_region
          %p269 = scmp.lt.s32.totalorder %s25, 1
          %s270 = scalar_select %p269, %s25, 1
          %s271 = smul.addr %s270, 8
          %s272 = scalar_lea.vmem %s1, %s271
        $region44: #{tpu_custom_call.1} parent=39 // pred_fallthru
          _
        // Predicated region
        $region45: #{tpu_custom_call.1} parent=39 // pred_check
          %p273 = pneg %p71
        $region46: #{tpu_custom_call.1} parent=39 // pred_check_branch
          %275 = sbr.rel (%p273) target = $region48
        $region47: #{tpu_custom_call.1} parent=39 // pred_region
          %s276 = sand.u32 %s61, 1
          %s277 = scalar_lea.sflag [#allocation5], %s276
          %s278 = sand.u32 %s61, 1
          %s279 = smul.addr %s278, 8
          %s280 = scalar_lea.vmem [#allocation4], %s279
          %s282 = ssub.s32 128, 128
          %283 = vsyncadd %s277, %s282
          %s284 = smul.addr %s25, 128
          %s285 = scalar_lea.hbm %s2, %s284
          %s287 = sshll.u32 %s280, 4
          %s288 = int_to_ptr.vmem [resolvable:$true] %s287
          %290 = dma.hbm_to_vmem [thread:$0]  %s285, 128, %s288, %s277
        $region48: #{tpu_custom_call.1} parent=39 // pred_fallthru
          _
      $region40: #{tpu_custom_call.1} parent=5 // pred_fallthru
        _
      %p291 = scmp.le.s32.totalorder 1, %s25
      %p292 = scmp.lt.s32.totalorder %s25, 3
      %p293 = pnand %p291, %p292
      %p294 = pneg %p293
      // Predicated region
      $region49: #{tpu_custom_call.1} parent=5 // pred_check
        _
      $region50: #{tpu_custom_call.1} parent=5 // pred_check_branch
        %296 = sbr.rel (%p293) target = $region52
      $region51: #{tpu_custom_call.1} parent=5 // pred_region
        %s297 = ssub.s32 %s25, 1
        %s298 = sand.u32 %s64, 1
        %s299 = scalar_lea.sflag [#allocation5], %s298
        %s300 = sand.u32 %s64, 1
        %s301 = smul.addr %s300, 8
        %s302 = scalar_lea.vmem [#allocation4], %s301
        // Predicated region
        $region53: #{tpu_custom_call.1} parent=51 // pred_check
          %p303 = pneg %p77
        $region54: #{tpu_custom_call.1} parent=51 // pred_check_branch
          %305 = sbr.rel (%p303) target = $region56
        $region55: #{tpu_custom_call.1} parent=51 // pred_region
          %306 = dma.done %s299, 128
        $region56: #{tpu_custom_call.1} parent=51 // pred_fallthru
          _
        %p307 = scmp.lt.s32.totalorder %s30, 1
        %s308 = scalar_select %p307, %s30, 1
        %s309 = smul.addr %s308, 8
        %s310 = scalar_lea.vmem %s1, %s309
        %p311 = pneg %p51
        %p312 = pneg %p48
        %s313 = sand.u32 %s64, 1
        %s314 = scalar_lea.sflag [#allocation5], %s313
        %s315 = sand.u32 %s64, 1
        %s316 = smul.addr %s315, 8
        %s317 = scalar_lea.vmem [#allocation4], %s316
        %p318 = pneg %p77
        %p319 = pneg %p74
        %p320 = pneg %p98
        %p321 = pneg %p95
        %p322 = pneg %p119
        %p323 = pneg %p116
        %p324 = pneg %p140
        %p325 = pneg %p137
        %p326 = pneg %p161
        %p327 = pneg %p158
        %p328 = pneg %p182
        %p329 = pneg %p179
        %p330 = pneg %p203
        %p331 = pneg %p200
        %p332 = pneg %p229
        %p333 = pneg %p226
        %s334 = sand.u32 %s216, 1
        %s335 = scalar_lea.sflag [#allocation6], %s334
        %s336 = sand.u32 %s216, 1
        %s337 = smul.addr %s336, 8
        %s338 = scalar_lea.vmem [#allocation7], %s337
        %p339 = scmp.lt.s32.totalorder %s30, 1
        %s340 = scalar_select %p339, %s30, 1
        %s341 = smul.addr %s340, 8
        %s342 = scalar_lea.vmem %s1, %s341
        %s344 = smul.u32 %s30, 8
        %v345 = vlaneseq
        %v346 = vshrl.u32 %v345, 7
        %vm347 = vcmp.eq.s32.totalorder %v346, 0
        %s348 = sld [smem:[#allocation3 + %s344]]
        %v349 = vstv %s348
        %v350 = vsel %vm347, %v349, 0
        %vm351 = vcmp.eq.s32.totalorder %v346, 1
        %s352 = sadd.s32 %s344, 1
        %s353 = sld [smem:[#allocation3 + %s352]]
        %v354 = vstv %s353
        %v355 = vsel %vm351, %v354, %v350
        %vm356 = vcmp.eq.s32.totalorder %v346, 2
        %s357 = sadd.s32 %s344, 2
        %s358 = sld [smem:[#allocation3 + %s357]]
        %v359 = vstv %s358
        %v360 = vsel %vm356, %v359, %v355
        %vm361 = vcmp.eq.s32.totalorder %v346, 3
        %s362 = sadd.s32 %s344, 3
        %s363 = sld [smem:[#allocation3 + %s362]]
        %v364 = vstv %s363
        %v365 = vsel %vm361, %v364, %v360
        %vm366 = vcmp.eq.s32.totalorder %v346, 4
        %s367 = sadd.s32 %s344, 4
        %s368 = sld [smem:[#allocation3 + %s367]]
        %v369 = vstv %s368
        %v370 = vsel %vm366, %v369, %v365
        %vm371 = vcmp.eq.s32.totalorder %v346, 5
        %s372 = sadd.s32 %s344, 5
        %s373 = sld [smem:[#allocation3 + %s372]]
        %v374 = vstv %s373
        %v375 = vsel %vm371, %v374, %v370
        %vm376 = vcmp.eq.s32.totalorder %v346, 6
        %s377 = sadd.s32 %s344, 6
        %s378 = sld [smem:[#allocation3 + %s377]]
        %v379 = vstv %s378
        %v380 = vsel %vm376, %v379, %v375
        %vm381 = vcmp.eq.s32.totalorder %v346, 7
        %s382 = sadd.s32 %s344, 7
        %s383 = sld [smem:[#allocation3 + %s382]]
        %v384 = vstv %s383
        %v385 = vsel %vm381, %v384, %v380
        %v386 = vlaneseq
        %v387 = vand.u32 %v386, 127
        %vm388 = vcmp.lt.s32.totalorder %v387, %v385
        %v389 = vld [vmem:[%s342] sm:$0xff]
        %v390 = vld [vmem:[%s302] sm:$0xff]
        %v391 = vsel %vm388, %v389, 4294967295
        %v392 = vlaneseq
        %v393 = vshrl.u32 %v392, 7
        %v394 = vsub.s32 0, %v393
        %v395 = vrot.slane %v391, %v394
        %397 = vbcast.lane.b32.xlu0 %v395, 256
        %v398 = vpop.permute.xlu0 %397
        %s400 = sor.u32 256, 8
        %401 = vbcast.lane.b32.xlu0 %v395, %s400
        %v402 = vpop.permute.xlu0 %401
        %v403 = vlaneseq
        %v404 = vshrl.u32 %v403, 7
        %v405 = vsub.s32 1, %v404
        %v406 = vrot.slane %v391, %v405
        %408 = vbcast.lane.b32.xlu0 %v406, 256
        %v409 = vpop.permute.xlu0 %408
        %s411 = sor.u32 256, 8
        %412 = vbcast.lane.b32.xlu0 %v406, %s411
        %v413 = vpop.permute.xlu0 %412
        %v414 = vlaneseq
        %v415 = vshrl.u32 %v414, 7
        %v416 = vsub.s32 2, %v415
        %v417 = vrot.slane %v391, %v416
        %419 = vbcast.lane.b32.xlu0 %v417, 256
        %v420 = vpop.permute.xlu0 %419
        %s422 = sor.u32 256, 8
        %423 = vbcast.lane.b32.xlu0 %v417, %s422
        %v424 = vpop.permute.xlu0 %423
        %v425 = vlaneseq
        %v426 = vshrl.u32 %v425, 7
        %v427 = vsub.s32 3, %v426
        %v428 = vrot.slane %v391, %v427
        %430 = vbcast.lane.b32.xlu0 %v428, 256
        %v431 = vpop.permute.xlu0 %430
        %s433 = sor.u32 256, 8
        %434 = vbcast.lane.b32.xlu0 %v428, %s433
        %v435 = vpop.permute.xlu0 %434
        %v436 = vlaneseq
        %v437 = vshrl.u32 %v436, 7
        %v438 = vsub.s32 4, %v437
        %v439 = vrot.slane %v391, %v438
        %441 = vbcast.lane.b32.xlu0 %v439, 256
        %v442 = vpop.permute.xlu0 %441
        %s444 = sor.u32 256, 8
        %445 = vbcast.lane.b32.xlu0 %v439, %s444
        %v446 = vpop.permute.xlu0 %445
        %v447 = vlaneseq
        %v448 = vshrl.u32 %v447, 7
        %v449 = vsub.s32 5, %v448
        %v450 = vrot.slane %v391, %v449
        %452 = vbcast.lane.b32.xlu0 %v450, 256
        %v453 = vpop.permute.xlu0 %452
        %s455 = sor.u32 256, 8
        %456 = vbcast.lane.b32.xlu0 %v450, %s455
        %v457 = vpop.permute.xlu0 %456
        %v458 = vlaneseq
        %v459 = vshrl.u32 %v458, 7
        %v460 = vsub.s32 6, %v459
        %v461 = vrot.slane %v391, %v460
        %463 = vbcast.lane.b32.xlu0 %v461, 256
        %v464 = vpop.permute.xlu0 %463
        %s466 = sor.u32 256, 8
        %467 = vbcast.lane.b32.xlu0 %v461, %s466
        %v468 = vpop.permute.xlu0 %467
        %v469 = vlaneseq
        %v470 = vshrl.u32 %v469, 7
        %v471 = vsub.s32 7, %v470
        %v472 = vrot.slane %v391, %v471
        %474 = vbcast.lane.b32.xlu0 %v472, 256
        %v475 = vpop.permute.xlu0 %474
        %s477 = sor.u32 256, 8
        %478 = vbcast.lane.b32.xlu0 %v472, %s477
        %v479 = vpop.permute.xlu0 %478
        %vm480 = vcmp.eq.s32.totalorder %v398, %v387
        %vm481 = vcmp.eq.s32.totalorder %v402, %v387
        %vm482 = vcmp.eq.s32.totalorder %v409, %v387
        %vm483 = vcmp.eq.s32.totalorder %v413, %v387
        %vm484 = vcmp.eq.s32.totalorder %v420, %v387
        %vm485 = vcmp.eq.s32.totalorder %v424, %v387
        %vm486 = vcmp.eq.s32.totalorder %v431, %v387
        %vm487 = vcmp.eq.s32.totalorder %v435, %v387
        %vm488 = vcmp.eq.s32.totalorder %v442, %v387
        %vm489 = vcmp.eq.s32.totalorder %v446, %v387
        %vm490 = vcmp.eq.s32.totalorder %v453, %v387
        %vm491 = vcmp.eq.s32.totalorder %v457, %v387
        %vm492 = vcmp.eq.s32.totalorder %v464, %v387
        %vm493 = vcmp.eq.s32.totalorder %v468, %v387
        %vm494 = vcmp.eq.s32.totalorder %v475, %v387
        %vm495 = vcmp.eq.s32.totalorder %v479, %v387
        %v496 = vsel %vm480, 1, 0
        %v497 = vsel %vm481, 1, 0
        %v498 = vsel %vm482, 1, 0
        %v499 = vsel %vm483, 1, 0
        %v500 = vsel %vm484, 1, 0
        %v501 = vsel %vm485, 1, 0
        %v502 = vsel %vm486, 1, 0
        %v503 = vsel %vm487, 1, 0
        %v504 = vsel %vm488, 1, 0
        %v505 = vsel %vm489, 1, 0
        %v506 = vsel %vm490, 1, 0
        %v507 = vsel %vm491, 1, 0
        %v508 = vsel %vm492, 1, 0
        %v509 = vsel %vm493, 1, 0
        %v510 = vsel %vm494, 1, 0
        %v511 = vsel %vm495, 1, 0
        %v512 = vcvt.s32.f32 %v496
        %v513 = vcvt.s32.f32 %v497
        %v514 = vcvt.s32.f32 %v498
        %v515 = vcvt.s32.f32 %v499
        %v516 = vcvt.s32.f32 %v500
        %v517 = vcvt.s32.f32 %v501
        %v518 = vcvt.s32.f32 %v502
        %v519 = vcvt.s32.f32 %v503
        %v520 = vcvt.s32.f32 %v504
        %v521 = vcvt.s32.f32 %v505
        %v522 = vcvt.s32.f32 %v506
        %v523 = vcvt.s32.f32 %v507
        %v524 = vcvt.s32.f32 %v508
        %v525 = vcvt.s32.f32 %v509
        %v526 = vcvt.s32.f32 %v510
        %v527 = vcvt.s32.f32 %v511
        %vm528 = vcmask 523264
        %v529 = vsel %vm528, %v512, 0.0
        %v530 = vsel %vm528, %v513, 0.0
        %v531 = vadd.f32 %v529, %v530
        %v532 = vrot.slane %v531, 4
        %v533 = vadd.f32 %v531, %v532
        %v534 = vrot.slane %v533, 2
        %v535 = vadd.f32 %v533, %v534
        %v536 = vrot.slane %v535, 1
        %v537 = vadd.f32 %v535, %v536
        %v538 = vsel %vm528, %v514, 0.0
        %v539 = vsel %vm528, %v515, 0.0
        %v540 = vadd.f32 %v538, %v539
        %v541 = vrot.slane %v540, 4
        %v542 = vadd.f32 %v540, %v541
        %v543 = vrot.slane %v542, 2
        %v544 = vadd.f32 %v542, %v543
        %v545 = vrot.slane %v544, 1
        %v546 = vadd.f32 %v544, %v545
        %v547 = vsel %vm528, %v516, 0.0
        %v548 = vsel %vm528, %v517, 0.0
        %v549 = vadd.f32 %v547, %v548
        %v550 = vrot.slane %v549, 4
        %v551 = vadd.f32 %v549, %v550
        %v552 = vrot.slane %v551, 2
        %v553 = vadd.f32 %v551, %v552
        %v554 = vrot.slane %v553, 1
        %v555 = vadd.f32 %v553, %v554
        %v556 = vsel %vm528, %v518, 0.0
        %v557 = vsel %vm528, %v519, 0.0
        %v558 = vadd.f32 %v556, %v557
        %v559 = vrot.slane %v558, 4
        %v560 = vadd.f32 %v558, %v559
        %v561 = vrot.slane %v560, 2
        %v562 = vadd.f32 %v560, %v561
        %v563 = vrot.slane %v562, 1
        %v564 = vadd.f32 %v562, %v563
        %v565 = vsel %vm528, %v520, 0.0
        %v566 = vsel %vm528, %v521, 0.0
        %v567 = vadd.f32 %v565, %v566
        %v568 = vrot.slane %v567, 4
        %v569 = vadd.f32 %v567, %v568
        %v570 = vrot.slane %v569, 2
        %v571 = vadd.f32 %v569, %v570
        %v572 = vrot.slane %v571, 1
        %v573 = vadd.f32 %v571, %v572
        %v574 = vsel %vm528, %v522, 0.0
        %v575 = vsel %vm528, %v523, 0.0
        %v576 = vadd.f32 %v574, %v575
        %v577 = vrot.slane %v576, 4
        %v578 = vadd.f32 %v576, %v577
        %v579 = vrot.slane %v578, 2
        %v580 = vadd.f32 %v578, %v579
        %v581 = vrot.slane %v580, 1
        %v582 = vadd.f32 %v580, %v581
        %v583 = vsel %vm528, %v524, 0.0
        %v584 = vsel %vm528, %v525, 0.0
        %v585 = vadd.f32 %v583, %v584
        %v586 = vrot.slane %v585, 4
        %v587 = vadd.f32 %v585, %v586
        %v588 = vrot.slane %v587, 2
        %v589 = vadd.f32 %v587, %v588
        %v590 = vrot.slane %v589, 1
        %v591 = vadd.f32 %v589, %v590
        %v592 = vsel %vm528, %v526, 0.0
        %v593 = vsel %vm528, %v527, 0.0
        %v594 = vadd.f32 %v592, %v593
        %v595 = vrot.slane %v594, 4
        %v596 = vadd.f32 %v594, %v595
        %v597 = vrot.slane %v596, 2
        %v598 = vadd.f32 %v596, %v597
        %v599 = vrot.slane %v598, 1
        %v600 = vadd.f32 %v598, %v599
        %v601 = vpack.c.bf16 %v537, %v537
        %v602 = vpack.c.bf16 %v546, %v546
        %v603 = vpack.c.bf16 %v555, %v555
        %v604 = vpack.c.bf16 %v564, %v564
        %v605 = vpack.c.bf16 %v573, %v573
        %v606 = vpack.c.bf16 %v582, %v582
        %v607 = vpack.c.bf16 %v591, %v591
        %v608 = vpack.c.bf16 %v600, %v600
        %v609 = vld [vmem:[%s3] sm:$0xf]
        %v610 = vld [vmem:[%s3 + $0x4] sm:$0xf]
        %v611 = vld [vmem:[%s3 + $0x8] sm:$0xf]
        %v612 = vld [vmem:[%s3 + $0xc] sm:$0xf]
        %v613 = vld [vmem:[%s3 + $0x10] sm:$0xf]
        %v614 = vld [vmem:[%s3 + $0x14] sm:$0xf]
        %v615 = vld [vmem:[%s3 + $0x18] sm:$0xf]
        %v616 = vld [vmem:[%s3 + $0x1c] sm:$0xf]
        %vm617 = vcmp.gt.s32.totalorder %v385, 0
        %v618 = vsel %vm617, %v385, 0
        %vm619 = vcmp.lt.s32.totalorder %v618, 16
        %v620 = vsel %vm619, %v618, 16
        %v621 = vcvt.s32.f32 %v620
        %vm622 = vcmp.eq.s32.totalorder %v390, 0
        %vm623 = vmand %vm388, %vm622
        %v624 = vsel %vm623, 1.0, 0.0
        %vm625 = vcmask 130048
        %v626 = vsel %vm625, %v624, 0.0
        %627 = vadd.xlane.f32.xlu0 %v626
        %v628 = vpop.xlane.xlu0 %627
        %v629 = vsub.f32 %v621, %v628
        %v630 = vld [vmem:[%s4] sm:$0x3]
        %v631 = vlaneseq
        %v632 = vshrl.u32 %v631, 7
        %v633 = vsub.s32 0, %v632
        %v634 = vrot.slane %v630, %v633
        %v635 = vmul.f32 %v628, %v634
        %v636 = vlaneseq
        %v637 = vshrl.u32 %v636, 7
        %v638 = vsub.s32 1, %v637
        %v639 = vrot.slane %v630, %v638
        %v640 = vmul.f32 %v629, %v639
        %v641 = vadd.f32 %v635, %v640
        %v642 = vmax.f32 %v621, 1.0
        %v651 = vunpack.c.l.b16 %v601
        %v652 = vunpack.c.l.b16 %v602
        %v653 = vunpack.c.l.b16 %v603
        %v654 = vunpack.c.l.b16 %v604
        %v655 = vunpack.c.l.b16 %v605
        %v656 = vunpack.c.l.b16 %v606
        %v657 = vunpack.c.l.b16 %v607
        %v658 = vunpack.c.l.b16 %v608
        %vm659 = vcmask 1041409
        %v660 = vsel %vm659, %v652, %v651
        %vm661 = vcmask 1042434
        %v662 = vsel %vm661, %v653, %v660
        %vm663 = vcmask 1043459
        %v664 = vsel %vm663, %v654, %v662
        %vm665 = vcmask 1044484
        %v666 = vsel %vm665, %v655, %v664
        %vm667 = vcmask 1045509
        %v668 = vsel %vm667, %v656, %v666
        %vm669 = vcmask 1046534
        %v670 = vsel %vm669, %v657, %v668
        %vm671 = vcmask 1047559
        %v672 = vsel %vm671, %v658, %v670
        %v673 = vpack.c.b16 %v672, %v672
        %v682 = vunpack.c.l.b16 %v609
        %v683 = vunpack.c.l.b16 %v610
        %v684 = vunpack.c.l.b16 %v611
        %v685 = vunpack.c.l.b16 %v612
        %v686 = vunpack.c.l.b16 %v613
        %v687 = vunpack.c.l.b16 %v614
        %v688 = vunpack.c.l.b16 %v615
        %v689 = vunpack.c.l.b16 %v616
        %v690 = vpack.c.b16 %v683, %v682
        %v691 = vpack.c.b16 %v685, %v684
        %v692 = vpack.c.b16 %v687, %v686
        %v693 = vpack.c.b16 %v689, %v688
        %v699 = vsel %vm528, %v673, 0
        %701 = vmatprep.subr.bf16.mxu0 0
        %702 = vmatpush1.bf16.msra.mxu0 %v690
        %703 = vmatprep.subr.bf16.mxu0 0
        %704 = vmatpush1.bf16.msra.mxu0 %v691
        %705 = vmatprep.subr.bf16.mxu0 0
        %706 = vmatpush1.bf16.msra.mxu0 %v692
        %707 = vmatprep.subr.bf16.mxu0 0
        %708 = vmatpush1.bf16.msra.mxu0 %v693
        %709 = vmatprep.subr.bf16.mxu0 0
        %710 = vmatpush1.bf16.msra.mxu0 0
        %711 = vmatprep.subr.bf16.mxu0 0
        %712 = vmatpush1.bf16.msra.mxu0 0
        %713 = vmatprep.subr.bf16.mxu0 0
        %714 = vmatpush1.bf16.msra.mxu0 0
        %715 = vmatprep.subr.bf16.mxu0 0
        %716 = vmatpush1.bf16.msra.mxu0 0
        %717 = vmatprep.subr.bf16.mxu0 0
        %718 = vmatpush1.bf16.msra.mxu0 0
        %719 = vmatprep.subr.bf16.mxu0 0
        %720 = vmatpush1.bf16.msra.mxu0 0
        %721 = vmatprep.subr.bf16.mxu0 0
        %722 = vmatpush1.bf16.msra.mxu0 0
        %723 = vmatprep.subr.bf16.mxu0 0
        %724 = vmatpush1.bf16.msra.mxu0 0
        %725 = vmatprep.subr.bf16.mxu0 0
        %726 = vmatpush1.bf16.msra.mxu0 0
        %727 = vmatprep.subr.bf16.mxu0 0
        %728 = vmatpush1.bf16.msra.mxu0 0
        %729 = vmatprep.subr.bf16.mxu0 0
        %730 = vmatpush1.bf16.msra.mxu0 0
        %731 = vmatprep.subr.bf16.mxu0 0
        %732 = vmatpush1.bf16.msra.mxu0 0
        %733 = vmatprep.mubr.bf16.mxu0 0
        %734 = vmatmul.mubr.bf16.gmra.mrb[0].mxu0 %v699
        %v735 = vpop.f32.mrb[0].mxu0
        %v736 = vadd.f32 %v641, %v735
        %v737 = vpop.f32.mrb[0].mxu0
        %v738 = vpop.f32.mrb[0].mxu0
        %v739 = vpop.f32.mrb[0].mxu0
        %740 = vdwg.mxu0
        %v741 = vrcp.pop %v642
        %v742 = vmul.f32 %v736, %v741
        %v743 = vpack.c.bf16 %v742, %v742
        %v744 = vld [vmem:[%s5] sm:$0xf]
        %v745 = vld [vmem:[%s5 + $0x4] sm:$0xf]
        %v746 = vld [vmem:[%s5 + $0x8] sm:$0xf]
        %v747 = vld [vmem:[%s5 + $0xc] sm:$0xf]
        %v748 = vld [vmem:[%s6] sm:$0x1]
        %v750 = vlaneseq
        %v751 = vshrl.u32 %v750, 7
        %v752 = vsub.s32 0, %v751
        %v753 = vrot.slane %v748, %v752
        %v759 = vunpack.c.l.b16 %v744
        %v760 = vunpack.c.l.b16 %v745
        %v761 = vunpack.c.l.b16 %v746
        %v762 = vunpack.c.l.b16 %v747
        %v763 = vpack.c.b16 %v760, %v759
        %v764 = vpack.c.b16 %v762, %v761
        %vm767 = vcmask 261120
        %v769 = vsel %vm767, %v743, 0
        %771 = vmatprep.subr.bf16.mxu0 0
        %772 = vmatpush1.bf16.msra.mxu0 %v763
        %773 = vmatprep.subr.bf16.mxu0 0
        %774 = vmatpush1.bf16.msra.mxu0 %v764
        %775 = vmatprep.subr.bf16.mxu0 0
        %776 = vmatpush1.bf16.msra.mxu0 0
        %777 = vmatprep.subr.bf16.mxu0 0
        %778 = vmatpush1.bf16.msra.mxu0 0
        %779 = vmatprep.subr.bf16.mxu0 0
        %780 = vmatpush1.bf16.msra.mxu0 0
        %781 = vmatprep.subr.bf16.mxu0 0
        %782 = vmatpush1.bf16.msra.mxu0 0
        %783 = vmatprep.subr.bf16.mxu0 0
        %784 = vmatpush1.bf16.msra.mxu0 0
        %785 = vmatprep.subr.bf16.mxu0 0
        %786 = vmatpush1.bf16.msra.mxu0 0
        %787 = vmatprep.subr.bf16.mxu0 0
        %788 = vmatpush1.bf16.msra.mxu0 0
        %789 = vmatprep.subr.bf16.mxu0 0
        %790 = vmatpush1.bf16.msra.mxu0 0
        %791 = vmatprep.subr.bf16.mxu0 0
        %792 = vmatpush1.bf16.msra.mxu0 0
        %793 = vmatprep.subr.bf16.mxu0 0
        %794 = vmatpush1.bf16.msra.mxu0 0
        %795 = vmatprep.subr.bf16.mxu0 0
        %796 = vmatpush1.bf16.msra.mxu0 0
        %797 = vmatprep.subr.bf16.mxu0 0
        %798 = vmatpush1.bf16.msra.mxu0 0
        %799 = vmatprep.subr.bf16.mxu0 0
        %800 = vmatpush1.bf16.msra.mxu0 0
        %801 = vmatprep.subr.bf16.mxu0 0
        %802 = vmatpush1.bf16.msra.mxu0 0
        %803 = vmatprep.mubr.bf16.mxu0 0
        %804 = vmatmul.mubr.bf16.gmra.mrb[0].mxu0 %v769
        %v805 = vpop.f32.mrb[0].mxu0
        %v806 = vadd.f32 %v753, %v805
        %v807 = vpop.f32.mrb[0].mxu0
        %v808 = vpop.f32.mrb[0].mxu0
        %v809 = vpop.f32.mrb[0].mxu0
        %810 = vdwg.mxu0
        %v811 = vtanh.pop %v806
        %v812 = vld [vmem:[%s7] sm:$0xff]
        %v813 = vld [vmem:[%s7 + $0x8] sm:$0xff]
        %v814 = vld [vmem:[%s7 + $0x10] sm:$0xff]
        %v815 = vld [vmem:[%s7 + $0x18] sm:$0xff]
        %v816 = vld [vmem:[%s8] sm:$0x1]
        %v818 = vlaneseq
        %v819 = vshrl.u32 %v818, 7
        %v820 = vsub.s32 0, %v819
        %v821 = vrot.slane %v816, %v820
        %v824 = vsel %vm767, %v811, 0
        %826 = vmatprep.subr.mxu0 0.0
        %827 = vmatpush1.msra.mxu0 %v812
        %828 = vmatprep.subr.mxu0 0.0
        %829 = vmatpush1.msra.mxu0 %v813
        %830 = vmatprep.subr.mxu0 0.0
        %831 = vmatpush1.msra.mxu0 %v814
        %832 = vmatprep.subr.mxu0 0.0
        %833 = vmatpush1.msra.mxu0 %v815
        %834 = vmatprep.subr.mxu0 0.0
        %835 = vmatpush1.msra.mxu0 0.0
        %836 = vmatprep.subr.mxu0 0.0
        %837 = vmatpush1.msra.mxu0 0.0
        %838 = vmatprep.subr.mxu0 0.0
        %839 = vmatpush1.msra.mxu0 0.0
        %840 = vmatprep.subr.mxu0 0.0
        %841 = vmatpush1.msra.mxu0 0.0
        %842 = vmatprep.subr.mxu0 0.0
        %843 = vmatpush1.msra.mxu0 0.0
        %844 = vmatprep.subr.mxu0 0.0
        %845 = vmatpush1.msra.mxu0 0.0
        %846 = vmatprep.subr.mxu0 0.0
        %847 = vmatpush1.msra.mxu0 0.0
        %848 = vmatprep.subr.mxu0 0.0
        %849 = vmatpush1.msra.mxu0 0.0
        %850 = vmatprep.subr.mxu0 0.0
        %851 = vmatpush1.msra.mxu0 0.0
        %852 = vmatprep.subr.mxu0 0.0
        %853 = vmatpush1.msra.mxu0 0.0
        %854 = vmatprep.subr.mxu0 0.0
        %855 = vmatpush1.msra.mxu0 0.0
        %856 = vmatprep.subr.mxu0 0.0
        %857 = vmatpush1.msra.mxu0 0.0
        %858 = vmatprep.subr.mxu0 0.0
        %859 = vmatpush1.msra.mxu0 0.0
        %860 = vmatprep.subr.mxu0 0.0
        %861 = vmatpush1.msra.mxu0 0.0
        %862 = vmatprep.subr.mxu0 0.0
        %863 = vmatpush1.msra.mxu0 0.0
        %864 = vmatprep.subr.mxu0 0.0
        %865 = vmatpush1.msra.mxu0 0.0
        %866 = vmatprep.subr.mxu0 0.0
        %867 = vmatpush1.msra.mxu0 0.0
        %868 = vmatprep.subr.mxu0 0.0
        %869 = vmatpush1.msra.mxu0 0.0
        %870 = vmatprep.subr.mxu0 0.0
        %871 = vmatpush1.msra.mxu0 0.0
        %872 = vmatprep.subr.mxu0 0.0
        %873 = vmatpush1.msra.mxu0 0.0
        %874 = vmatprep.subr.mxu0 0.0
        %875 = vmatpush1.msra.mxu0 0.0
        %876 = vmatprep.subr.mxu0 0.0
        %877 = vmatpush1.msra.mxu0 0.0
        %878 = vmatprep.subr.mxu0 0.0
        %879 = vmatpush1.msra.mxu0 0.0
        %880 = vmatprep.subr.mxu0 0.0
        %881 = vmatpush1.msra.mxu0 0.0
        %882 = vmatprep.subr.mxu0 0.0
        %883 = vmatpush1.msra.mxu0 0.0
        %884 = vmatprep.subr.mxu0 0.0
        %885 = vmatpush1.msra.mxu0 0.0
        %886 = vmatprep.subr.mxu0 0.0
        %887 = vmatpush1.msra.mxu0 0.0
        %888 = vmatprep.subr.mxu0 0.0
        %889 = vmatpush1.msra.mxu0 0.0
        %890 = vmatprep.mubr.f32.mxu0 0.0
        %891 = vmatmul.mubr.f32.gmra.mrb[0].mxu0 %v824
        %v892 = vpop.f32.mrb[0].mxu0
        %v893 = vadd.f32 %v821, %v892
        %v894 = vpop.f32.mrb[0].mxu0
        %895 = vdwg.mxu0
        %896 = vst [vmem:[%s338] sm:$0xff] %v893
        %s897 = sand.u32 %s216, 1
        %s898 = scalar_lea.sflag [#allocation6], %s897
        %s899 = sand.u32 %s216, 1
        %s900 = smul.addr %s899, 8
        %s901 = scalar_lea.vmem [#allocation7], %s900
        // Predicated region
        $region57: #{tpu_custom_call.1} parent=51 // pred_check
          %p902 = pneg %p226
        $region58: #{tpu_custom_call.1} parent=51 // pred_check_branch
          %904 = sbr.rel (%p902) target = $region60
        $region59: #{tpu_custom_call.1} parent=51 // pred_region
          %s906 = ssub.s32 128, 128
          %907 = vsyncadd %s898, %s906
          %s908 = smul.addr %s30, 128
          %s909 = scalar_lea.hbm %s9, %s908
          %s911 = sshll.u32 %s901, 4
          %s912 = int_to_ptr.vmem [resolvable:$true] %s911
          %914 = dma.vmem_to_hbm [thread:$0]  %s912, 128, %s909, %s898
        $region60: #{tpu_custom_call.1} parent=51 // pred_fallthru
          _
      $region52: #{tpu_custom_call.1} parent=5 // pred_fallthru
        _
      %p915 = scmp.le.s32.totalorder 2, %s25
      // Predicated region
      $region61: #{tpu_custom_call.1} parent=5 // pred_check
        %p916 = pneg %p915
      $region62: #{tpu_custom_call.1} parent=5 // pred_check_branch
        %918 = sbr.rel (%p916) target = $region64
      $region63: #{tpu_custom_call.1} parent=5 // pred_region
        %s919 = ssub.s32 %s25, 2
        // Predicated region
        $region65: #{tpu_custom_call.1} parent=63 // pred_check
          %p920 = pneg %p232
        $region66: #{tpu_custom_call.1} parent=63 // pred_check_branch
          %922 = sbr.rel (%p920) target = $region68
        $region67: #{tpu_custom_call.1} parent=63 // pred_region
          %s923 = sand.u32 %s217, 1
          %s924 = scalar_lea.sflag [#allocation6], %s923
          %s925 = sand.u32 %s217, 1
          %s926 = smul.addr %s925, 8
          %s927 = scalar_lea.vmem [#allocation7], %s926
          %928 = dma.done %s924, 128
        $region68: #{tpu_custom_call.1} parent=63 // pred_fallthru
          _
      $region64: #{tpu_custom_call.1} parent=5 // pred_fallthru
        _
    $region6: #{tpu_custom_call.1} parent=1 // loop_footer
      %s29 = sadd.s32 1, %s25
    $region7: #{tpu_custom_call.1} parent=1 // loop_footer_branch
      %24 = sbr.rel target = $region3
    $region8: #{tpu_custom_call.1} parent=1 // loop_exit
      _
    %929 = vsyncpa [#allocation5], 1
    %s930 = scalar_lea.sflag [#allocation5], 1
    %931 = vsyncpa %s930, 1
    %932 = vsyncpa [#allocation6], 1
    %s933 = scalar_lea.sflag [#allocation6], 1
    %934 = vsyncpa %s933, 1

</llo_original>
